<compile_context>
chip_gen: v6e
topology: v6e:2x2x1
jax: 0.10.0
libtpu: 0.0.40
codegen_flags: <defaults>
</compile_context>

<pallas_src>
import functools

import numpy as np

import jax
import jax.numpy as jnp
from jax.experimental import pallas as pl
from jax.experimental.pallas import tpu as pltpu


def _round_up(x, m):
    return (x + m - 1) // m * m


def _pick_batch_tile(B):
    """Rows per grid step.  Big tiles amortize per-step overhead (~0.35us);
    keep >=2 steps when B is large enough so v7x's two TensorCores share the
    "parallel" batch axis.  On 1-TC chips (v5e/v6e) this is simply 'as big as
    reasonable'."""
    if B <= 256:
        return _round_up(B, 8)                 # one step; tiny problem anyway
    if B <= 1024:
        return _round_up(pl.cdiv(B, 2), 8)     # exactly 2 steps
    return 512                                 # >=3 steps of 512 rows


def tree_attention_kernel(q_ref, k_ref, selr_ref, sela_ref, v_ref, o_ref, *,
                          n_pad, n_sub):
    k = k_ref[...]            # (q_dim, 2*Npad)  [left cols | right cols]
    sel_r = selr_ref[...]     # (Npad, Lpad)  1 iff path goes RIGHT at node
    sel_a = sela_ref[...]     # (Npad, Lpad)  1 iff node is an ancestor
    v = v_ref[...]            # (Lpad, Vpad)  zero-padded leaf values
    cdt = k.dtype             # MXU operand dtype (f32 or bf16)

    tb = q_ref.shape[0]
    sub = tb // n_sub
    # Independent row sub-blocks: sub-block j+1's score matmul (MXU) overlaps
    # sub-block j's softplus chain (VPU + EUP).
    for j in range(n_sub):
        rows = pl.ds(j * sub, sub)                                   # static
        q = q_ref[rows, :]
        # Fused left/right scores; cols [0,Npad) = left, [Npad,2Npad) = right
        # (128-aligned static slices).
        s = jnp.dot(q, k, preferred_element_type=jnp.float32)        # (sub, 2Npad)
        d = s[:, n_pad:] - s[:, :n_pad]                              # sR - sL
        # Stable softplus: -log p_left = softplus(d); log p_right = d - softplus(d).
        # (1 exp + 1 log per node; padded nodes give the finite value log 2 and
        #  are excluded by the zero selector rows.)
        sp = jnp.maximum(d, 0.0) + jnp.log(1.0 + jnp.exp(-jnp.abs(d)))
        # leaf log-prob = sum over ancestors of the chosen branch's log-prob
        #               = d @ sel_right - softplus(d) @ sel_ancestor
        leaf_logp = (
            jnp.dot(d.astype(cdt), sel_r, preferred_element_type=jnp.float32)
            - jnp.dot(sp.astype(cdt), sel_a, preferred_element_type=jnp.float32))
        leaf_p = jnp.exp(leaf_logp)                                  # (sub, Lpad)
        # Padded leaves get p = exp(0) = 1 but multiply zero value rows.
        o_ref[rows, :] = jnp.dot(leaf_p.astype(v.dtype), v,
                                 preferred_element_type=jnp.float32
                                 ).astype(o_ref.dtype)


def prepare_tree_params(key, value, depth, dtype=jnp.float32):
    """One-time parameter packing / padding (hoisted out of the hot path).

    dtype=jnp.bfloat16 is recommended on v6e/v7x: full-rate MXU, half the
    query HBM traffic and half the resident VMEM (selectors are exact 0/1 in
    bf16).  Keep f32 when bit-tight accuracy matters."""
    N = (1 << depth) - 1
    L = 1 << depth
    q_dim = key.shape[-1]
    v_dim = value.shape[-1]

    n_pad = _round_up(N, 128)
    l_pad = _round_up(L, 128)
    v_pad = _round_up(v_dim, 128)

    key_np = np.asarray(key, np.float32)
    value_np = np.asarray(value, np.float32)

    # Pre-transposed packed keys: column j = left key of node j, column
    # n_pad + j = right key of node j (NN-layout matmul in the kernel).
    k = np.zeros((q_dim, 2 * n_pad), np.float32)
    k[:, :N] = key_np[:, 0, :].T
    k[:, n_pad:n_pad + N] = key_np[:, 1, :].T

    # Zero-padded leaf values.
    v = np.zeros((l_pad, v_pad), np.float32)
    v[:L, :v_dim] = value_np

    # sel_right[n, l] = 1 iff node n is an ancestor of leaf l and the path goes
    # right at n; sel_anc[n, l] = 1 iff n is an ancestor of l (either side).
    # Heap indexing (children of i: 2i+1, 2i+2).  Padded rows/cols stay zero.
    sel_r = np.zeros((n_pad, l_pad), np.float32)
    sel_a = np.zeros((n_pad, l_pad), np.float32)
    leaves = np.arange(L)
    for lvl in range(depth):
        off = (1 << lvl) - 1
        anc = off + (leaves >> (depth - lvl))
        bit = (leaves >> (depth - 1 - lvl)) & 1
        sel_a[anc, leaves] = 1.0
        sel_r[anc, leaves] = bit.astype(np.float32)

    meta = dict(depth=depth, q_dim=q_dim, v_dim=v_dim,
                n_pad=n_pad, l_pad=l_pad, v_pad=v_pad, dtype=dtype)
    return (jnp.asarray(k, dtype), jnp.asarray(sel_r, dtype),
            jnp.asarray(sel_a, dtype), jnp.asarray(v, dtype), meta)


def tree_attention_packed(query, k, sel_r, sel_a, v, meta):
    B = query.shape[0]
    q_dim, v_dim = meta["q_dim"], meta["v_dim"]
    n_pad, l_pad, v_pad = meta["n_pad"], meta["l_pad"], meta["v_pad"]
    dtype = meta["dtype"]
    assert query.shape == (B, q_dim)

    tb = _pick_batch_tile(B)
    grid = pl.cdiv(B, tb)

    # In-kernel row sub-blocking (only when the tile is big enough and the
    # sub-block stays a multiple of 8 sublanes).
    n_sub = 1
    for cand in (4, 2):
        if tb >= cand * 64 and tb % (cand * 8) == 0:
            n_sub = cand
            break

    # No zero-pad copy of the streaming operand: q_dim is taken at full extent
    # and the (possibly partial) last batch block is masked on write by Pallas.
    qx = query.astype(dtype)

    itemsize = jnp.dtype(dtype).itemsize
    const_bytes = (k.size + sel_r.size + sel_a.size + v.size) * itemsize
    stream_bytes = tb * (q_dim * itemsize + v_pad * 4)

    # Deep trees: single-buffer the grid-constant operands (they never change
    # across grid steps) to halve their resident VMEM; leave default buffering
    # at small depth.
    const_kw = {}
    if const_bytes > (8 << 20):
        const_kw = dict(pipeline_mode=pl.Buffered(1))
        resident = const_bytes + 2 * stream_bytes
    else:
        resident = 2 * const_bytes + 2 * stream_bytes

    vmem_limit = None
    if resident > (24 << 20):
        # Default scoped VMEM limit is well below physical on every generation;
        # raise it for deep trees instead of failing / forcing tiny tiles.
        vmem_limit = int(min(resident * 5 // 4 + (4 << 20), 100 << 20))
        # TODO(synk): for depth >= ~11 tile the leaf axis with a second grid
        # dimension + VMEM accumulator instead of keeping selectors resident.

    cost = pl.CostEstimate(
        flops=2 * B * (q_dim * 2 * n_pad + 2 * n_pad * l_pad + l_pad * v_pad),
        transcendentals=B * (2 * n_pad + l_pad),
        bytes_accessed=B * q_dim * itemsize + B * v_pad * 4 + const_bytes)

    out = pl.pallas_call(
        functools.partial(tree_attention_kernel, n_pad=n_pad, n_sub=n_sub),
        out_shape=jax.ShapeDtypeStruct((B, v_pad), jnp.float32),
        grid_spec=pltpu.PrefetchScalarGridSpec(
            num_scalar_prefetch=0,
            grid=(grid,),
            in_specs=[
                pl.BlockSpec((tb, q_dim), lambda i: (i, 0)),                 # query tile
                pl.BlockSpec((q_dim, 2 * n_pad), lambda i: (0, 0), **const_kw),  # keys
                pl.BlockSpec((n_pad, l_pad), lambda i: (0, 0), **const_kw),      # sel_right
                pl.BlockSpec((n_pad, l_pad), lambda i: (0, 0), **const_kw),      # sel_anc
                pl.BlockSpec((l_pad, v_pad), lambda i: (0, 0), **const_kw),      # values
            ],
            out_specs=pl.BlockSpec((tb, v_pad), lambda i: (i, 0)),
        ),
        compiler_params=pltpu.CompilerParams(
            dimension_semantics=("parallel",),
            vmem_limit_bytes=vmem_limit),
        cost_estimate=cost,
    )(qx, k, sel_r, sel_a, v)

    if v_pad != v_dim:
        out = out[:, :v_dim]
    return out


def tree_attention(query, depth, key, value, dtype=jnp.float32):
    """Convenience wrapper matching TreeModel.forward.  For hot-path use, call
    prepare_tree_params once and reuse its outputs with tree_attention_packed."""
    k, sel_r, sel_a, v, meta = prepare_tree_params(key, value, depth, dtype=dtype)
    return tree_attention_packed(query, k, sel_r, sel_a, v, meta)


def tree_attention_ref(query, depth, key, value):
    """Pure-JAX reference (heap-ordered path product)."""
    sL = query @ key[:, 0, :].T
    sR = query @ key[:, 1, :].T
    m = jnp.maximum(sL, sR)
    eL = jnp.exp(sL - m)
    eR = jnp.exp(sR - m)
    pL = eL / (eL + eR)
    pR = eR / (eL + eR)
    B = query.shape[0]
    probs = jnp.ones((B, 1), jnp.float32)
    for lvl in range(depth):
        off = (1 << lvl) - 1
        n = 1 << lvl
        lp = pL[:, off:off + n]
        rp = pR[:, off:off + n]
        probs = jnp.stack([probs * lp, probs * rp], axis=-1).reshape(B, 2 * n)
    return probs @ value


if __name__ == "__main__":
    depth, q_dim, v_dim, batch = 3, 32, 32, 8

    k0, k1, k2 = jax.random.split(jax.random.PRNGKey(0), 3)
    # Deterministic "randn" parameters, mirroring nn.Parameter(torch.randn(...)).
    key_param = jax.random.normal(k0, ((1 << depth) - 1, 2, q_dim), jnp.float32)
    value_param = jax.random.normal(k1, (1 << depth, v_dim), jnp.float32)
    query = jax.random.normal(k2, (batch, q_dim), jnp.float32)

    # --- f32 path: tight check against the pure-JAX reference -------------
    out = tree_attention(query, depth, key_param, value_param)
    out = jax.block_until_ready(out)
    ref = tree_attention_ref(query, depth, key_param, value_param)
    assert out.shape == (batch, v_dim)
    assert jnp.allclose(out, ref, atol=1e-4, rtol=1e-4)

    # --- bf16 MXU-operand path (v6e/v7x perf recommendation) --------------
    # Compared against a reference computed from bf16-rounded inputs; the loose
    # tolerance covers the in-kernel bf16 rounding of d / softplus / leaf_p.
    packed_bf16 = prepare_tree_params(key_param, value_param, depth,
                                      dtype=jnp.bfloat16)
    out_bf16 = tree_attention_packed(query, *packed_bf16)
    out_bf16 = jax.block_until_ready(out_bf16)
    rq = query.astype(jnp.bfloat16).astype(jnp.float32)
    rk = key_param.astype(jnp.bfloat16).astype(jnp.float32)
    rv = value_param.astype(jnp.bfloat16).astype(jnp.float32)
    ref_bf16 = tree_attention_ref(rq, depth, rk, rv)
    assert out_bf16.shape == (batch, v_dim)
    assert jnp.allclose(out_bf16, ref_bf16, atol=1e-1, rtol=1e-1)

    print("KERNEL_OK")
</pallas_src>

<mosaic_0001>
module attributes {stable_mosaic.version = 11 : i64} {
  func.func @tree_attention_kernel(%arg0: i32, %arg1: memref<8x32xf32, #tpu.memory_space<vmem>>, %arg2: memref<32x256xf32, #tpu.memory_space<vmem>>, %arg3: memref<128x128xf32, #tpu.memory_space<vmem>>, %arg4: memref<128x128xf32, #tpu.memory_space<vmem>>, %arg5: memref<128x128xf32, #tpu.memory_space<vmem>>, %arg6: memref<8x128xf32, #tpu.memory_space<vmem>>) attributes {dimension_semantics = [#tpu.dimension_semantics<parallel>], iteration_bounds = array<i64: 1>, scalar_prefetch = 0 : i64, scratch_operands = 0 : i64, tpu.core_type = #tpu.core_type<tc>, window_params = [{transform_indices = @transform_0, window_bounds = array<i64: 8, 32>}, {pipeline_mode = #tpu.pipeline_mode<synchronous>, transform_indices = @transform_1, window_bounds = array<i64: 32, 256>}, {pipeline_mode = #tpu.pipeline_mode<synchronous>, transform_indices = @transform_2, window_bounds = array<i64: 128, 128>}, {pipeline_mode = #tpu.pipeline_mode<synchronous>, transform_indices = @transform_3, window_bounds = array<i64: 128, 128>}, {pipeline_mode = #tpu.pipeline_mode<synchronous>, transform_indices = @transform_4, window_bounds = array<i64: 128, 128>}, {transform_indices = @transform_5, window_bounds = array<i64: 8, 128>}]} {
    %c0 = arith.constant 0 : index
    %c0_0 = arith.constant 0 : index
    %0 = vector.load %arg2[%c0, %c0_0] : memref<32x256xf32, #tpu.memory_space<vmem>>, vector<32x256xf32>
    %c0_1 = arith.constant 0 : index
    %c0_2 = arith.constant 0 : index
    %1 = vector.load %arg3[%c0_1, %c0_2] : memref<128x128xf32, #tpu.memory_space<vmem>>, vector<128x128xf32>
    %c0_3 = arith.constant 0 : index
    %c0_4 = arith.constant 0 : index
    %2 = vector.load %arg4[%c0_3, %c0_4] : memref<128x128xf32, #tpu.memory_space<vmem>>, vector<128x128xf32>
    %c0_5 = arith.constant 0 : index
    %c0_6 = arith.constant 0 : index
    %3 = vector.load %arg5[%c0_5, %c0_6] : memref<128x128xf32, #tpu.memory_space<vmem>>, vector<128x128xf32>
    %c0_7 = arith.constant 0 : index
    %c0_8 = arith.constant 0 : index
    %4 = vector.load %arg1[%c0_7, %c0_8] : memref<8x32xf32, #tpu.memory_space<vmem>>, vector<8x32xf32>
    %cst = arith.constant dense<0.000000e+00> : vector<8x256xf32>
    %5 = tpu.matmul %4, %0, %cst {dimension_numbers = #tpu.dot_dimension_numbers<[1], [0], [0], [1], [0, 0, 1, 1], [], []>} : vector<8x32xf32>, vector<32x256xf32>, vector<8x256xf32> -> vector<8x256xf32>
    %6 = vector.extract_strided_slice %5 {offsets = [0, 128], sizes = [8, 128], strides = [1, 1]} : vector<8x256xf32> to vector<8x128xf32>
    %7 = vector.extract_strided_slice %5 {offsets = [0, 0], sizes = [8, 128], strides = [1, 1]} : vector<8x256xf32> to vector<8x128xf32>
    %8 = arith.subf %6, %7 : vector<8x128xf32>
    %cst_9 = arith.constant 0.000000e+00 : f32
    %9 = vector.broadcast %cst_9 : f32 to vector<8x128xf32>
    %10 = arith.maximumf %8, %9 : vector<8x128xf32>
    %11 = math.absf %8 : vector<8x128xf32>
    %cst_10 = arith.constant 0.000000e+00 : f32
    %12 = vector.broadcast %cst_10 : f32 to vector<8x128xf32>
    %13 = arith.subf %12, %11 : vector<8x128xf32>
    %14 = math.exp %13 : vector<8x128xf32>
    %cst_11 = arith.constant 1.000000e+00 : f32
    %15 = vector.broadcast %cst_11 : f32 to vector<8x128xf32>
    %16 = arith.addf %15, %14 : vector<8x128xf32>
    %17 = math.log %16 : vector<8x128xf32>
    %18 = arith.addf %10, %17 : vector<8x128xf32>
    %cst_12 = arith.constant dense<0.000000e+00> : vector<8x128xf32>
    %19 = tpu.matmul %8, %1, %cst_12 {dimension_numbers = #tpu.dot_dimension_numbers<[1], [0], [0], [1], [0, 0, 1, 1], [], []>} : vector<8x128xf32>, vector<128x128xf32>, vector<8x128xf32> -> vector<8x128xf32>
    %cst_13 = arith.constant dense<0.000000e+00> : vector<8x128xf32>
    %20 = tpu.matmul %18, %2, %cst_13 {dimension_numbers = #tpu.dot_dimension_numbers<[1], [0], [0], [1], [0, 0, 1, 1], [], []>} : vector<8x128xf32>, vector<128x128xf32>, vector<8x128xf32> -> vector<8x128xf32>
    %21 = arith.subf %19, %20 : vector<8x128xf32>
    %22 = math.exp %21 : vector<8x128xf32>
    %cst_14 = arith.constant dense<0.000000e+00> : vector<8x128xf32>
    %23 = tpu.matmul %22, %3, %cst_14 {dimension_numbers = #tpu.dot_dimension_numbers<[1], [0], [0], [1], [0, 0, 1, 1], [], []>} : vector<8x128xf32>, vector<128x128xf32>, vector<8x128xf32> -> vector<8x128xf32>
    %c0_15 = arith.constant 0 : index
    %c0_16 = arith.constant 0 : index
    %24 = vector.load %arg6[%c0_15, %c0_16] : memref<8x128xf32, #tpu.memory_space<vmem>>, vector<8x128xf32>
    tpu.vector_store %arg6[%c0_15, %c0_16], %23 {strides = array<i32>} : memref<8x128xf32, #tpu.memory_space<vmem>>, vector<8x128xf32>,
    return
  }
  func.func @transform_0(%arg0: i32) -> (i32, i32) {
    %c0_i32 = arith.constant 0 : i32
    %c0_i32_0 = arith.constant 0 : i32
    return %arg0, %c0_i32 : i32, i32
  }
  func.func @transform_1(%arg0: i32) -> (i32, i32) {
    %c0_i32 = arith.constant 0 : i32
    %c0_i32_0 = arith.constant 0 : i32
    %c0_i32_1 = arith.constant 0 : i32
    return %c0_i32, %c0_i32_0 : i32, i32
  }
  func.func @transform_2(%arg0: i32) -> (i32, i32) {
    %c0_i32 = arith.constant 0 : i32
    %c0_i32_0 = arith.constant 0 : i32
    %c0_i32_1 = arith.constant 0 : i32
    return %c0_i32, %c0_i32_0 : i32, i32
  }
  func.func @transform_3(%arg0: i32) -> (i32, i32) {
    %c0_i32 = arith.constant 0 : i32
    %c0_i32_0 = arith.constant 0 : i32
    %c0_i32_1 = arith.constant 0 : i32
    return %c0_i32, %c0_i32_0 : i32, i32
  }
  func.func @transform_4(%arg0: i32) -> (i32, i32) {
    %c0_i32 = arith.constant 0 : i32
    %c0_i32_0 = arith.constant 0 : i32
    %c0_i32_1 = arith.constant 0 : i32
    return %c0_i32, %c0_i32_0 : i32, i32
  }
  func.func @transform_5(%arg0: i32) -> (i32, i32) {
    %c0_i32 = arith.constant 0 : i32
    %c0_i32_0 = arith.constant 0 : i32
    return %arg0, %c0_i32 : i32, i32
  }
}

</mosaic_0001>

<llo_original>
// kernel: tpu_custom_call.1
$region0: #{tpu_custom_call.1}
  #allocation0 [shape = 'u32[]', space=smem, size = 0x4, offset = 0x4, fixed_abs, tag = 'smem constant byte address 0x4 - core index']
  #allocation1 [shape = 'u32[144,128]{1,0:T(1,128)}', space=vmem, size = 0x12000, scoped, tag = 'internal scratch']
  %s0 = inlined_call_operand.hbm [shape: f32[8,32], index: 0, kind: input, shape index: {}]
  %s1 = inlined_call_operand.hbm [shape: f32[32,256], index: 1, kind: input, shape index: {}]
  %s2 = inlined_call_operand.hbm [shape: f32[128,128], index: 2, kind: input, shape index: {}]
  %s3 = inlined_call_operand.hbm [shape: f32[128,128], index: 3, kind: input, shape index: {}]
  %s4 = inlined_call_operand.hbm [shape: f32[128,128], index: 4, kind: input, shape index: {}]
  %s5 = inlined_call_operand.hbm [shape: f32[8,128], index: 5, kind: output, shape index: {}]
  %s6 = sld [smem:[#allocation0]]
  $region50: #{tpu_custom_call.1} parent=0
    _
  %s8 = ssub.s32 1, %s6
  %s9 = scalar_select 0, %s8, %s6
  $region1: #{tpu_custom_call.1} parent=0
    #allocation2 [shape = 'u8[4096]{0}', space=vmem, size = 0x1000, scoped, tag = 'input window, operand 0, single buffered']
    #allocation3 [shape = 's32[1]{0}', space=sflag, size = 0x4, scoped, tag = 'scoped memory for tpu_custom_call.1']
    #allocation4 [shape = 's32[1]{0}', space=sflag, size = 0x4, scoped, tag = 'scoped memory for tpu_custom_call.1']
    #allocation5 [shape = 'u8[32768]{0}', space=vmem, size = 0x8000, scoped, tag = 'input window, operand 1, single buffered']
    #allocation6 [shape = 's32[1]{0}', space=sflag, size = 0x4, scoped, tag = 'scoped memory for tpu_custom_call.1']
    #allocation7 [shape = 'u8[65536]{0}', space=vmem, size = 0x10000, scoped, tag = 'input window, operand 2, single buffered']
    #allocation8 [shape = 'u8[65536]{0}', space=vmem, size = 0x10000, scoped, tag = 'input window, operand 3, single buffered']
    #allocation9 [shape = 's32[1]{0}', space=sflag, size = 0x4, scoped, tag = 'scoped memory for tpu_custom_call.1']
    #allocation10 [shape = 'u8[65536]{0}', space=vmem, size = 0x10000, scoped, tag = 'input window, operand 4, single buffered']
    #allocation11 [shape = 'u8[4096]{0}', space=vmem, size = 0x1000, scoped, tag = 'output window, operand 0, single buffered']
    %10 = vsyncpa [#allocation3], 0
    %11 = vsyncpa [#allocation6], 0
    %12 = vsyncpa [#allocation9], 0
    %13 = vsyncpa [#allocation4], 0
    // Predicated region
    $region2: #{tpu_custom_call.1} parent=1 // pred_check
      _
    $region3: #{tpu_custom_call.1} parent=1 // pred_check_branch
      %15 = sbr.rel (0) target = $region5
    $region4: #{tpu_custom_call.1} parent=1 // pred_region
      %s17 = ssub.s32 128, 128
      %18 = vsyncadd [#allocation3], %s17
      %s20 = sshll.u32 [#allocation2], 4
      %s21 = int_to_ptr.vmem [resolvable:$true] %s20
      %23 = dma.hbm_to_vmem [thread:$0]  %s0, 128, %s21, [#allocation3]
    $region5: #{tpu_custom_call.1} parent=1 // pred_fallthru
      _
    // Predicated region
    $region6: #{tpu_custom_call.1} parent=1 // pred_check
      _
    $region7: #{tpu_custom_call.1} parent=1 // pred_check_branch
      %25 = sbr.rel (0) target = $region9
    $region8: #{tpu_custom_call.1} parent=1 // pred_region
      %s27 = ssub.s32 1024, 1024
      %28 = vsyncadd [#allocation6], %s27
      %s29 = sshll.u32 [#allocation5], 4
      %s30 = int_to_ptr.vmem [resolvable:$true] %s29
      %35 = dma.hbm_to_vmem [thread:$0]  %s1, 1024, %s30, [#allocation6], 256, 256, 16
    $region9: #{tpu_custom_call.1} parent=1 // pred_fallthru
      _
    // Predicated region
    $region10: #{tpu_custom_call.1} parent=1 // pred_check
      _
    $region11: #{tpu_custom_call.1} parent=1 // pred_check_branch
      %37 = sbr.rel (0) target = $region13
    $region12: #{tpu_custom_call.1} parent=1 // pred_region
      %s39 = ssub.s32 2048, 2048
      %40 = vsyncadd [#allocation6], %s39
      %s41 = sshll.u32 [#allocation7], 4
      %s42 = int_to_ptr.vmem [resolvable:$true] %s41
      %47 = dma.hbm_to_vmem [thread:$0]  %s2, 2048, %s42, [#allocation6], 128, 128, 8
    $region13: #{tpu_custom_call.1} parent=1 // pred_fallthru
      _
    // Predicated region
    $region14: #{tpu_custom_call.1} parent=1 // pred_check
      _
    $region15: #{tpu_custom_call.1} parent=1 // pred_check_branch
      %49 = sbr.rel (0) target = $region17
    $region16: #{tpu_custom_call.1} parent=1 // pred_region
      %s51 = ssub.s32 2048, 2048
      %52 = vsyncadd [#allocation9], %s51
      %s53 = sshll.u32 [#allocation8], 4
      %s54 = int_to_ptr.vmem [resolvable:$true] %s53
      %59 = dma.hbm_to_vmem [thread:$0]  %s3, 2048, %s54, [#allocation9], 128, 128, 8
    $region17: #{tpu_custom_call.1} parent=1 // pred_fallthru
      _
    // Predicated region
    $region18: #{tpu_custom_call.1} parent=1 // pred_check
      _
    $region19: #{tpu_custom_call.1} parent=1 // pred_check_branch
      %61 = sbr.rel (0) target = $region21
    $region20: #{tpu_custom_call.1} parent=1 // pred_region
      %s63 = ssub.s32 2048, 2048
      %64 = vsyncadd [#allocation9], %s63
      %s65 = sshll.u32 [#allocation10], 4
      %s66 = int_to_ptr.vmem [resolvable:$true] %s65
      %71 = dma.hbm_to_vmem [thread:$0]  %s4, 2048, %s66, [#allocation9], 128, 128, 8
    $region21: #{tpu_custom_call.1} parent=1 // pred_fallthru
      _
    // Predicated region
    $region22: #{tpu_custom_call.1} parent=1 // pred_check
      _
    $region23: #{tpu_custom_call.1} parent=1 // pred_check_branch
      %73 = sbr.rel (0) target = $region25
    $region24: #{tpu_custom_call.1} parent=1 // pred_region
      %74 = dma.done [#allocation3], 128
    $region25: #{tpu_custom_call.1} parent=1 // pred_fallthru
      _
    // Predicated region
    $region26: #{tpu_custom_call.1} parent=1 // pred_check
      _
    $region27: #{tpu_custom_call.1} parent=1 // pred_check_branch
      %76 = sbr.rel (0) target = $region29
    $region28: #{tpu_custom_call.1} parent=1 // pred_region
      %77 = dma.done [#allocation6], 1024
    $region29: #{tpu_custom_call.1} parent=1 // pred_fallthru
      _
    // Predicated region
    $region30: #{tpu_custom_call.1} parent=1 // pred_check
      _
    $region31: #{tpu_custom_call.1} parent=1 // pred_check_branch
      %79 = sbr.rel (0) target = $region33
    $region32: #{tpu_custom_call.1} parent=1 // pred_region
      %80 = dma.done [#allocation6], 2048
    $region33: #{tpu_custom_call.1} parent=1 // pred_fallthru
      _
    // Predicated region
    $region34: #{tpu_custom_call.1} parent=1 // pred_check
      _
    $region35: #{tpu_custom_call.1} parent=1 // pred_check_branch
      %82 = sbr.rel (0) target = $region37
    $region36: #{tpu_custom_call.1} parent=1 // pred_region
      %83 = dma.done [#allocation9], 2048
    $region37: #{tpu_custom_call.1} parent=1 // pred_fallthru
      _
    // Predicated region
    $region38: #{tpu_custom_call.1} parent=1 // pred_check
      _
    $region39: #{tpu_custom_call.1} parent=1 // pred_check_branch
      %85 = sbr.rel (0) target = $region41
    $region40: #{tpu_custom_call.1} parent=1 // pred_region
      %86 = dma.done [#allocation9], 2048
    $region41: #{tpu_custom_call.1} parent=1 // pred_fallthru
      _
    %v87 = vld [vmem:[#allocation5] sm:$0xff]
    %v88 = vld [vmem:[#allocation5 + $0x8] sm:$0xff]
    %v89 = vld [vmem:[#allocation5 + $0x10] sm:$0xff]
    %v90 = vld [vmem:[#allocation5 + $0x18] sm:$0xff]
    %v91 = vld [vmem:[#allocation5 + $0x20] sm:$0xff]
    %v92 = vld [vmem:[#allocation5 + $0x28] sm:$0xff]
    %v93 = vld [vmem:[#allocation5 + $0x30] sm:$0xff]
    %v94 = vld [vmem:[#allocation5 + $0x38] sm:$0xff]
    %v95 = vld [vmem:[#allocation7] sm:$0xff]
    %v96 = vld [vmem:[#allocation7 + $0x8] sm:$0xff]
    %v97 = vld [vmem:[#allocation7 + $0x10] sm:$0xff]
    %v98 = vld [vmem:[#allocation7 + $0x18] sm:$0xff]
    %v99 = vld [vmem:[#allocation7 + $0x20] sm:$0xff]
    %v100 = vld [vmem:[#allocation7 + $0x28] sm:$0xff]
    %v101 = vld [vmem:[#allocation7 + $0x30] sm:$0xff]
    %v102 = vld [vmem:[#allocation7 + $0x38] sm:$0xff]
    %v103 = vld [vmem:[#allocation7 + $0x40] sm:$0xff]
    %v104 = vld [vmem:[#allocation7 + $0x48] sm:$0xff]
    %v105 = vld [vmem:[#allocation7 + $0x50] sm:$0xff]
    %v106 = vld [vmem:[#allocation7 + $0x58] sm:$0xff]
    %v107 = vld [vmem:[#allocation7 + $0x60] sm:$0xff]
    %v108 = vld [vmem:[#allocation7 + $0x68] sm:$0xff]
    %v109 = vld [vmem:[#allocation7 + $0x70] sm:$0xff]
    %v110 = vld [vmem:[#allocation7 + $0x78] sm:$0xff]
    %v111 = vld [vmem:[#allocation8] sm:$0xff]
    %v112 = vld [vmem:[#allocation8 + $0x8] sm:$0xff]
    %v113 = vld [vmem:[#allocation8 + $0x10] sm:$0xff]
    %v114 = vld [vmem:[#allocation8 + $0x18] sm:$0xff]
    %v115 = vld [vmem:[#allocation8 + $0x20] sm:$0xff]
    %v116 = vld [vmem:[#allocation8 + $0x28] sm:$0xff]
    %v117 = vld [vmem:[#allocation8 + $0x30] sm:$0xff]
    %v118 = vld [vmem:[#allocation8 + $0x38] sm:$0xff]
    %v119 = vld [vmem:[#allocation8 + $0x40] sm:$0xff]
    %v120 = vld [vmem:[#allocation8 + $0x48] sm:$0xff]
    %v121 = vld [vmem:[#allocation8 + $0x50] sm:$0xff]
    %v122 = vld [vmem:[#allocation8 + $0x58] sm:$0xff]
    %v123 = vld [vmem:[#allocation8 + $0x60] sm:$0xff]
    %v124 = vld [vmem:[#allocation8 + $0x68] sm:$0xff]
    %v125 = vld [vmem:[#allocation8 + $0x70] sm:$0xff]
    %v126 = vld [vmem:[#allocation8 + $0x78] sm:$0xff]
    %v127 = vld [vmem:[#allocation10] sm:$0xff]
    %v128 = vld [vmem:[#allocation10 + $0x8] sm:$0xff]
    %v129 = vld [vmem:[#allocation10 + $0x10] sm:$0xff]
    %v130 = vld [vmem:[#allocation10 + $0x18] sm:$0xff]
    %v131 = vld [vmem:[#allocation10 + $0x20] sm:$0xff]
    %v132 = vld [vmem:[#allocation10 + $0x28] sm:$0xff]
    %v133 = vld [vmem:[#allocation10 + $0x30] sm:$0xff]
    %v134 = vld [vmem:[#allocation10 + $0x38] sm:$0xff]
    %v135 = vld [vmem:[#allocation10 + $0x40] sm:$0xff]
    %v136 = vld [vmem:[#allocation10 + $0x48] sm:$0xff]
    %v137 = vld [vmem:[#allocation10 + $0x50] sm:$0xff]
    %v138 = vld [vmem:[#allocation10 + $0x58] sm:$0xff]
    %v139 = vld [vmem:[#allocation10 + $0x60] sm:$0xff]
    %v140 = vld [vmem:[#allocation10 + $0x68] sm:$0xff]
    %v141 = vld [vmem:[#allocation10 + $0x70] sm:$0xff]
    %v142 = vld [vmem:[#allocation10 + $0x78] sm:$0xff]
    %v143 = vld [vmem:[#allocation2] sm:$0xff]
    %vm144 = vcmask 261120
    %v146 = vsel %vm144, %v143, 0
    %148 = vmatprep.subr.mxu0 0.0
    %149 = vmatpush1.msra.mxu0 0.0
    %150 = vmatprep.subr.mxu0 0.0
    %151 = vmatpush1.msra.mxu0 0.0
    %152 = vmatprep.subr.mxu0 0.0
    %153 = vmatpush1.msra.mxu0 0.0
    %154 = vmatprep.subr.mxu0 0.0
    %155 = vmatpush1.msra.mxu0 0.0
    %156 = vmatprep.subr.mxu0 0.0
    %157 = vmatpush1.msra.mxu0 0.0
    %158 = vmatprep.subr.mxu0 0.0
    %159 = vmatpush1.msra.mxu0 0.0
    %160 = vmatprep.subr.mxu0 0.0
    %161 = vmatpush1.msra.mxu0 0.0
    %162 = vmatprep.subr.mxu0 0.0
    %163 = vmatpush1.msra.mxu0 0.0
    %164 = vmatprep.subr.mxu0 0.0
    %165 = vmatpush1.msra.mxu0 0.0
    %166 = vmatprep.subr.mxu0 0.0
    %167 = vmatpush1.msra.mxu0 0.0
    %168 = vmatprep.subr.mxu0 0.0
    %169 = vmatpush1.msra.mxu0 0.0
    %170 = vmatprep.subr.mxu0 0.0
    %171 = vmatpush1.msra.mxu0 0.0
    %172 = vmatprep.subr.mxu0 %v94
    %173 = vmatpush1.msra.mxu0 %v93
    %174 = vmatprep.subr.mxu0 %v92
    %175 = vmatpush1.msra.mxu0 %v91
    %176 = vmatprep.subr.mxu0 %v90
    %177 = vmatpush1.msra.mxu0 %v89
    %178 = vmatprep.subr.mxu0 %v88
    %179 = vmatpush1.msra.mxu0 %v87
    %180 = vmatprep.subr.mxu0 0.0
    %181 = vmatpush2.msra.mxu0 0.0
    %182 = vmatprep.subr.mxu0 0.0
    %183 = vmatpush2.msra.mxu0 0.0
    %184 = vmatprep.subr.mxu0 0.0
    %185 = vmatpush2.msra.mxu0 0.0
    %186 = vmatprep.subr.mxu0 0.0
    %187 = vmatpush2.msra.mxu0 0.0
    %188 = vmatprep.subr.mxu0 0.0
    %189 = vmatpush2.msra.mxu0 0.0
    %190 = vmatprep.subr.mxu0 0.0
    %191 = vmatpush2.msra.mxu0 0.0
    %192 = vmatprep.subr.mxu0 0.0
    %193 = vmatpush2.msra.mxu0 0.0
    %194 = vmatprep.subr.mxu0 0.0
    %195 = vmatpush2.msra.mxu0 0.0
    %196 = vmatprep.subr.mxu0 0.0
    %197 = vmatpush2.msra.mxu0 0.0
    %198 = vmatprep.subr.mxu0 0.0
    %199 = vmatpush2.msra.mxu0 0.0
    %200 = vmatprep.subr.mxu0 0.0
    %201 = vmatpush2.msra.mxu0 0.0
    %202 = vmatprep.subr.mxu0 0.0
    %203 = vmatpush2.msra.mxu0 0.0
    %204 = vmatprep.subr.mxu0 0.0
    %205 = vmatpush2.msra.mxu0 0.0
    %206 = vmatprep.subr.mxu0 0.0
    %207 = vmatpush2.msra.mxu0 0.0
    %208 = vmatprep.subr.mxu0 0.0
    %209 = vmatpush2.msra.mxu0 0.0
    %210 = vmatprep.subr.mxu0 0.0
    %211 = vmatpush2.msra.mxu0 0.0
    %212 = vmatprep.mubr.f32.mxu0 0.0
    %213 = vmatmul.mubr.f32.gmra.mxu0 %v146
    %v214 = vpop.f32.mrf.mxu0
    %v215 = vadd.f32 0.0, %v214
    %v216 = vpop.f32.mrf.mxu0
    %v217 = vadd.f32 0.0, %v216
    %218 = vdwg.mxu0
    %v219 = vsub.f32 %v217, %v215
    %v220 = vmax.f32 %v219, 0.0
    %v221 = vand.u32 2147483647, %v219
    %v222 = vsub.f32 0.0, %v221
    %v223 = vmul.f32 %v222, 1.442695
    %v224 = vpow.pop %v223
    %v225 = vadd.f32 %v224, 1.0
    %v226 = vlog2.pop %v225
    %v227 = vmul.f32 %v226, 0.6931472
    %v228 = vadd.f32 %v220, %v227
    %229 = vmatprep.subr.mxu0 0.0
    %230 = vmatpush1.msra.mxu0 %v110
    %231 = vmatprep.subr.mxu0 0.0
    %232 = vmatpush1.msra.mxu0 %v109
    %233 = vmatprep.subr.mxu0 0.0
    %234 = vmatpush1.msra.mxu0 %v108
    %235 = vmatprep.subr.mxu0 0.0
    %236 = vmatpush1.msra.mxu0 %v107
    %237 = vmatprep.subr.mxu0 0.0
    %238 = vmatpush1.msra.mxu0 %v106
    %239 = vmatprep.subr.mxu0 0.0
    %240 = vmatpush1.msra.mxu0 %v105
    %241 = vmatprep.subr.mxu0 0.0
    %242 = vmatpush1.msra.mxu0 %v104
    %243 = vmatprep.subr.mxu0 0.0
    %244 = vmatpush1.msra.mxu0 %v103
    %245 = vmatprep.subr.mxu0 0.0
    %246 = vmatpush1.msra.mxu0 %v102
    %247 = vmatprep.subr.mxu0 0.0
    %248 = vmatpush1.msra.mxu0 %v101
    %249 = vmatprep.subr.mxu0 0.0
    %250 = vmatpush1.msra.mxu0 %v100
    %251 = vmatprep.subr.mxu0 0.0
    %252 = vmatpush1.msra.mxu0 %v99
    %253 = vmatprep.subr.mxu0 0.0
    %254 = vmatpush1.msra.mxu0 %v98
    %255 = vmatprep.subr.mxu0 0.0
    %256 = vmatpush1.msra.mxu0 %v97
    %257 = vmatprep.subr.mxu0 0.0
    %258 = vmatpush1.msra.mxu0 %v96
    %259 = vmatprep.subr.mxu0 0.0
    %260 = vmatpush1.msra.mxu0 %v95
    %261 = vmatprep.subr.mxu0 0.0
    %262 = vmatpush2.msra.mxu0 0.0
    %263 = vmatprep.subr.mxu0 0.0
    %264 = vmatpush2.msra.mxu0 0.0
    %265 = vmatprep.subr.mxu0 0.0
    %266 = vmatpush2.msra.mxu0 0.0
    %267 = vmatprep.subr.mxu0 0.0
    %268 = vmatpush2.msra.mxu0 0.0
    %269 = vmatprep.subr.mxu0 0.0
    %270 = vmatpush2.msra.mxu0 0.0
    %271 = vmatprep.subr.mxu0 0.0
    %272 = vmatpush2.msra.mxu0 0.0
    %273 = vmatprep.subr.mxu0 0.0
    %274 = vmatpush2.msra.mxu0 0.0
    %275 = vmatprep.subr.mxu0 0.0
    %276 = vmatpush2.msra.mxu0 0.0
    %277 = vmatprep.subr.mxu0 0.0
    %278 = vmatpush2.msra.mxu0 0.0
    %279 = vmatprep.subr.mxu0 0.0
    %280 = vmatpush2.msra.mxu0 0.0
    %281 = vmatprep.subr.mxu0 0.0
    %282 = vmatpush2.msra.mxu0 0.0
    %283 = vmatprep.subr.mxu0 0.0
    %284 = vmatpush2.msra.mxu0 0.0
    %285 = vmatprep.subr.mxu0 0.0
    %286 = vmatpush2.msra.mxu0 0.0
    %287 = vmatprep.subr.mxu0 0.0
    %288 = vmatpush2.msra.mxu0 0.0
    %289 = vmatprep.subr.mxu0 0.0
    %290 = vmatpush2.msra.mxu0 0.0
    %291 = vmatprep.subr.mxu0 0.0
    %292 = vmatpush2.msra.mxu0 0.0
    %293 = vmatprep.mubr.f32.mxu0 0.0
    %294 = vmatmul.mubr.f32.gmra.mxu0 %v219
    %v295 = vpop.f32.mrf.mxu0
    %v296 = vadd.f32 0.0, %v295
    %v297 = vpop.f32.mrf.mxu0
    %298 = vdwg.mxu0
    %299 = vmatprep.subr.mxu0 0.0
    %300 = vmatpush1.msra.mxu0 %v126
    %301 = vmatprep.subr.mxu0 0.0
    %302 = vmatpush1.msra.mxu0 %v125
    %303 = vmatprep.subr.mxu0 0.0
    %304 = vmatpush1.msra.mxu0 %v124
    %305 = vmatprep.subr.mxu0 0.0
    %306 = vmatpush1.msra.mxu0 %v123
    %307 = vmatprep.subr.mxu0 0.0
    %308 = vmatpush1.msra.mxu0 %v122
    %309 = vmatprep.subr.mxu0 0.0
    %310 = vmatpush1.msra.mxu0 %v121
    %311 = vmatprep.subr.mxu0 0.0
    %312 = vmatpush1.msra.mxu0 %v120
    %313 = vmatprep.subr.mxu0 0.0
    %314 = vmatpush1.msra.mxu0 %v119
    %315 = vmatprep.subr.mxu0 0.0
    %316 = vmatpush1.msra.mxu0 %v118
    %317 = vmatprep.subr.mxu0 0.0
    %318 = vmatpush1.msra.mxu0 %v117
    %319 = vmatprep.subr.mxu0 0.0
    %320 = vmatpush1.msra.mxu0 %v116
    %321 = vmatprep.subr.mxu0 0.0
    %322 = vmatpush1.msra.mxu0 %v115
    %323 = vmatprep.subr.mxu0 0.0
    %324 = vmatpush1.msra.mxu0 %v114
    %325 = vmatprep.subr.mxu0 0.0
    %326 = vmatpush1.msra.mxu0 %v113
    %327 = vmatprep.subr.mxu0 0.0
    %328 = vmatpush1.msra.mxu0 %v112
    %329 = vmatprep.subr.mxu0 0.0
    %330 = vmatpush1.msra.mxu0 %v111
    %331 = vmatprep.subr.mxu0 0.0
    %332 = vmatpush2.msra.mxu0 0.0
    %333 = vmatprep.subr.mxu0 0.0
    %334 = vmatpush2.msra.mxu0 0.0
    %335 = vmatprep.subr.mxu0 0.0
    %336 = vmatpush2.msra.mxu0 0.0
    %337 = vmatprep.subr.mxu0 0.0
    %338 = vmatpush2.msra.mxu0 0.0
    %339 = vmatprep.subr.mxu0 0.0
    %340 = vmatpush2.msra.mxu0 0.0
    %341 = vmatprep.subr.mxu0 0.0
    %342 = vmatpush2.msra.mxu0 0.0
    %343 = vmatprep.subr.mxu0 0.0
    %344 = vmatpush2.msra.mxu0 0.0
    %345 = vmatprep.subr.mxu0 0.0
    %346 = vmatpush2.msra.mxu0 0.0
    %347 = vmatprep.subr.mxu0 0.0
    %348 = vmatpush2.msra.mxu0 0.0
    %349 = vmatprep.subr.mxu0 0.0
    %350 = vmatpush2.msra.mxu0 0.0
    %351 = vmatprep.subr.mxu0 0.0
    %352 = vmatpush2.msra.mxu0 0.0
    %353 = vmatprep.subr.mxu0 0.0
    %354 = vmatpush2.msra.mxu0 0.0
    %355 = vmatprep.subr.mxu0 0.0
    %356 = vmatpush2.msra.mxu0 0.0
    %357 = vmatprep.subr.mxu0 0.0
    %358 = vmatpush2.msra.mxu0 0.0
    %359 = vmatprep.subr.mxu0 0.0
    %360 = vmatpush2.msra.mxu0 0.0
    %361 = vmatprep.subr.mxu0 0.0
    %362 = vmatpush2.msra.mxu0 0.0
    %363 = vmatprep.mubr.f32.mxu0 0.0
    %364 = vmatmul.mubr.f32.gmra.mxu0 %v228
    %v365 = vpop.f32.mrf.mxu0
    %v366 = vadd.f32 0.0, %v365
    %v367 = vpop.f32.mrf.mxu0
    %368 = vdwg.mxu0
    %v369 = vsub.f32 %v296, %v366
    %v370 = vmul.f32 %v369, 1.442695
    %v371 = vpow.pop %v370
    %372 = vmatprep.subr.mxu0 0.0
    %373 = vmatpush1.msra.mxu0 %v142
    %374 = vmatprep.subr.mxu0 0.0
    %375 = vmatpush1.msra.mxu0 %v141
    %376 = vmatprep.subr.mxu0 0.0
    %377 = vmatpush1.msra.mxu0 %v140
    %378 = vmatprep.subr.mxu0 0.0
    %379 = vmatpush1.msra.mxu0 %v139
    %380 = vmatprep.subr.mxu0 0.0
    %381 = vmatpush1.msra.mxu0 %v138
    %382 = vmatprep.subr.mxu0 0.0
    %383 = vmatpush1.msra.mxu0 %v137
    %384 = vmatprep.subr.mxu0 0.0
    %385 = vmatpush1.msra.mxu0 %v136
    %386 = vmatprep.subr.mxu0 0.0
    %387 = vmatpush1.msra.mxu0 %v135
    %388 = vmatprep.subr.mxu0 0.0
    %389 = vmatpush1.msra.mxu0 %v134
    %390 = vmatprep.subr.mxu0 0.0
    %391 = vmatpush1.msra.mxu0 %v133
    %392 = vmatprep.subr.mxu0 0.0
    %393 = vmatpush1.msra.mxu0 %v132
    %394 = vmatprep.subr.mxu0 0.0
    %395 = vmatpush1.msra.mxu0 %v131
    %396 = vmatprep.subr.mxu0 0.0
    %397 = vmatpush1.msra.mxu0 %v130
    %398 = vmatprep.subr.mxu0 0.0
    %399 = vmatpush1.msra.mxu0 %v129
    %400 = vmatprep.subr.mxu0 0.0
    %401 = vmatpush1.msra.mxu0 %v128
    %402 = vmatprep.subr.mxu0 0.0
    %403 = vmatpush1.msra.mxu0 %v127
    %404 = vmatprep.subr.mxu0 0.0
    %405 = vmatpush2.msra.mxu0 0.0
    %406 = vmatprep.subr.mxu0 0.0
    %407 = vmatpush2.msra.mxu0 0.0
    %408 = vmatprep.subr.mxu0 0.0
    %409 = vmatpush2.msra.mxu0 0.0
    %410 = vmatprep.subr.mxu0 0.0
    %411 = vmatpush2.msra.mxu0 0.0
    %412 = vmatprep.subr.mxu0 0.0
    %413 = vmatpush2.msra.mxu0 0.0
    %414 = vmatprep.subr.mxu0 0.0
    %415 = vmatpush2.msra.mxu0 0.0
    %416 = vmatprep.subr.mxu0 0.0
    %417 = vmatpush2.msra.mxu0 0.0
    %418 = vmatprep.subr.mxu0 0.0
    %419 = vmatpush2.msra.mxu0 0.0
    %420 = vmatprep.subr.mxu0 0.0
    %421 = vmatpush2.msra.mxu0 0.0
    %422 = vmatprep.subr.mxu0 0.0
    %423 = vmatpush2.msra.mxu0 0.0
    %424 = vmatprep.subr.mxu0 0.0
    %425 = vmatpush2.msra.mxu0 0.0
    %426 = vmatprep.subr.mxu0 0.0
    %427 = vmatpush2.msra.mxu0 0.0
    %428 = vmatprep.subr.mxu0 0.0
    %429 = vmatpush2.msra.mxu0 0.0
    %430 = vmatprep.subr.mxu0 0.0
    %431 = vmatpush2.msra.mxu0 0.0
    %432 = vmatprep.subr.mxu0 0.0
    %433 = vmatpush2.msra.mxu0 0.0
    %434 = vmatprep.subr.mxu0 0.0
    %435 = vmatpush2.msra.mxu0 0.0
    %436 = vmatprep.mubr.f32.mxu0 0.0
    %437 = vmatmul.mubr.f32.gmra.mxu0 %v371
    %v438 = vpop.f32.mrf.mxu0
    %v439 = vadd.f32 0.0, %v438
    %v440 = vpop.f32.mrf.mxu0
    %441 = vdwg.mxu0
    %442 = vst [vmem:[#allocation11] sm:$0xff] %v439
    // Predicated region
    $region42: #{tpu_custom_call.1} parent=1 // pred_check
      _
    $region43: #{tpu_custom_call.1} parent=1 // pred_check_branch
      %444 = sbr.rel (0) target = $region45
    $region44: #{tpu_custom_call.1} parent=1 // pred_region
      %s446 = ssub.s32 128, 128
      %447 = vsyncadd [#allocation4], %s446
      %s449 = sshll.u32 [#allocation11], 4
      %s450 = int_to_ptr.vmem [resolvable:$true] %s449
      %452 = dma.vmem_to_hbm [thread:$0]  %s450, 128, %s5, [#allocation4]
    $region45: #{tpu_custom_call.1} parent=1 // pred_fallthru
      _
    // Predicated region
    $region46: #{tpu_custom_call.1} parent=1 // pred_check
      _
    $region47: #{tpu_custom_call.1} parent=1 // pred_check_branch
      %454 = sbr.rel (0) target = $region49
    $region48: #{tpu_custom_call.1} parent=1 // pred_region
      %455 = dma.done [#allocation4], 128
    $region49: #{tpu_custom_call.1} parent=1 // pred_fallthru
      _
    %456 = vsyncpa [#allocation3], 1
    %457 = vsyncpa [#allocation6], 1
    %458 = vsyncpa [#allocation9], 1
    %459 = vsyncpa [#allocation4], 1

</llo_original>
